<compile_context>
chip_gen: v7x
topology: tpu7x:2x2x1
jax: 0.10.0
libtpu: 0.0.40
codegen_flags: <defaults>
</compile_context>

<pallas_src>
import numpy as np
import jax
import jax.numpy as jnp
from jax.experimental import pallas as pl
from jax.experimental.pallas import tpu as pltpu

BN_EPS = 1e-5
LANE = 128


def _round_up(a, m):
    return (a + m - 1) // m * m


# ----------------------------- fused Pallas kernel ---------------------------

def _fused_heads_kernel(x_ref, w1_ref, b1_ref, w2_ref, b2_ref,
                        w3_ref, wh_ref, b3_ref, o_ref):
    """All prediction heads for one row tile.

    x : (TM, C)       bf16  row tile of flattened (B*N, C) features
    w1: (C, H)        bf16  packed first-layer weights (eval-BN scale folded in)
    b1: (1, H)        f32   packed BN shift
    w2: (H, H)        bf16  block-diagonal second-layer weights (BN folded)
    b2: (1, H)        f32
    w3: (H, OUT_PAD)  bf16  block-diagonal third-layer weights
    wh: (C, OUT_PAD)  bf16  heading 1x1-conv weights (zero outside its columns)
    b3: (1, OUT_PAD)  f32   packed output biases (zero in padded lanes)
    o : (TM, OUT_PAD) f32   lane-dense packed head outputs
    """
    x = x_ref[...]
    h = jnp.dot(x, w1_ref[...], preferred_element_type=jnp.float32)
    h = jnp.maximum(h + b1_ref[...], 0.0)            # BN shift + ReLU in f32 (v5e VPU)
    h = jnp.dot(h.astype(w2_ref.dtype), w2_ref[...],
                preferred_element_type=jnp.float32)
    h = jnp.maximum(h + b2_ref[...], 0.0)
    out = jnp.dot(h.astype(w3_ref.dtype), w3_ref[...],
                  preferred_element_type=jnp.float32)
    # Fusing [w3; wh] into one (H+C, OUT_PAD) dot would need an in-kernel lane concat
    # of [h | x] (a relayout); kept as two dots per the measure-first guidance.
    out = out + jnp.dot(x, wh_ref[...], preferred_element_type=jnp.float32)
    o_ref[...] = out + b3_ref[...]


# ----------------------------- pallas_call wrapper ----------------------------

def _resident_spec(a):
    """Full-array block with a constant index map -> operand stays VMEM-resident."""
    nd = a.ndim
    return pl.BlockSpec(a.shape, lambda i, _nd=nd: (0,) * _nd)


def fused_heads(x_flat, packed, *, max_tile_m=512):
    """x_flat: (M, C) in packed compute dtype.  Returns (M, OUT_PAD) float32."""
    M, C = x_flat.shape
    out_pad = packed['out_pad']

    # Row tiling: double-buffered pipeline over (x, out) tiles while the ~90 KB of
    # packed weights are DMA'd once.  TILE_M is a multiple of 16 (bf16 sublane pack)
    # and M is padded up so every tile is full; padded rows are computed and
    # discarded (the math is row-independent, so correctness is unaffected).
    tm = min(max_tile_m, _round_up(M, 16))
    m_pad = _round_up(M, tm)
    if m_pad != M:
        x_flat = jnp.pad(x_flat, ((0, m_pad - M), (0, 0)))

    ins = [x_flat, packed['w1'], packed['b1'], packed['w2'], packed['b2'],
           packed['w3'], packed['wh'], packed['b3']]
    in_specs = [pl.BlockSpec((tm, C), lambda i: (i, 0))] + \
               [_resident_spec(a) for a in ins[1:]]

    # VMEM footprint: resident weights (~90 KB) + double-buffered x (tm*C bf16) and
    # out (tm*OUT_PAD f32) tiles ~= 0.7 MiB at the defaults -- far under the default
    # scoped limit on v5e/v6e and the 64 MiB v7x part.  Re-derive and set
    # vmem_limit_bytes explicitly if OUT_PAD / hidden ever grow substantially.
    out = pl.pallas_call(
        _fused_heads_kernel,
        out_shape=jax.ShapeDtypeStruct((m_pad, out_pad), jnp.float32),
        grid_spec=pltpu.PrefetchScalarGridSpec(
            num_scalar_prefetch=0,
            grid=(m_pad // tm,),
            in_specs=in_specs,
            out_specs=pl.BlockSpec((tm, out_pad), lambda i: (i, 0)),
        ),
        # Row tiles are independent: "parallel" lets v7x split them across its two
        # TensorCores (no effect on single-TC v5e/v6e).
        compiler_params=pltpu.CompilerParams(dimension_semantics=("parallel",)),
    )(*ins)
    return out[:M]


# ----------------------------- parameter init (per head) ---------------------

def _folded_bn(kg, kb, km, kv, n):
    gamma = 1.0 + 0.1 * jax.random.normal(kg, (n,))
    beta = 0.1 * jax.random.normal(kb, (n,))
    mean = 0.1 * jax.random.normal(km, (n,))
    var = jax.random.uniform(kv, (n,), minval=0.5, maxval=1.5)
    scale = gamma / jnp.sqrt(var + BN_EPS)
    shift = beta - mean * scale
    return (scale.reshape(1, n).astype(jnp.float32),
            shift.reshape(1, n).astype(jnp.float32))


def init_three_layer_mlp(key, dim, out_dim):
    ks = jax.random.split(key, 12)
    w1 = (0.1 * jax.random.normal(ks[0], (dim, dim))).astype(jnp.float32)
    s1, b1 = _folded_bn(ks[1], ks[2], ks[3], ks[4], dim)
    w2 = (0.1 * jax.random.normal(ks[5], (dim, dim))).astype(jnp.float32)
    s2, b2 = _folded_bn(ks[6], ks[7], ks[8], ks[9], dim)
    w3 = (0.1 * jax.random.normal(ks[10], (dim, out_dim))).astype(jnp.float32)
    b3 = (0.1 * jax.random.normal(ks[11], (1, out_dim))).astype(jnp.float32)
    return dict(w1=w1, s1=s1, b1=b1, w2=w2, s2=s2, b2=b2, w3=w3, b3=b3)


def init_conv1x1(key, dim, out_dim):
    kw, kb = jax.random.split(key, 2)
    return dict(w=(0.1 * jax.random.normal(kw, (dim, out_dim))).astype(jnp.float32),
                b=(0.1 * jax.random.normal(kb, (1, out_dim))).astype(jnp.float32))


# ----------------------------- head packing (one-time, init) -----------------

def pack_head_params(params, seed_feat_dim, *, objectness=True, heading=True,
                     compute_sem_scores=True, compute_dtype=jnp.bfloat16):
    """Fold eval-mode BN into conv weights/biases and pack all heads into a handful
    of wide arrays for the single fused kernel.

    Hidden layout : [objectness | center | size | sem] (enabled MLP heads), C each.
    Output columns: [objectness | center | heading | size | sem], zero-padded to a
    multiple of 128 lanes so the kernel store is lane-dense (unmasked vst).
    Do NOT zero-pad the hidden beyond the packed width: at C=32 it is already the
    right MXU shape on v5e (128x128) and rounds into one 256-wide weight group on
    v6e/v7x; any extra padding is pure zero-FLOP work.
    """
    C = seed_feat_dim
    mlp_names = (['objectness'] if objectness else []) + ['center', 'size'] + \
                (['sem'] if compute_sem_scores else [])

    col_order = []
    if objectness:
        col_order.append(('objectness', params['objectness']['w3'].shape[1]))
    col_order.append(('center', params['center']['w3'].shape[1]))
    if heading:
        col_order.append(('heading', params['heading']['w'].shape[1]))
    col_order.append(('size', params['size']['w3'].shape[1]))
    if compute_sem_scores:
        col_order.append(('sem', params['sem']['w3'].shape[1]))

    col_off, off = {}, 0
    for name, width in col_order:
        col_off[name] = (off, width)
        off += width
    out_pad = max(LANE, _round_up(off, LANE))

    # Guard: head columns must be disjoint and inside the slab so the padded lanes
    # (and neighbouring heads) of w3/wh/b3 stay exactly zero.
    claimed = np.zeros(out_pad, dtype=bool)
    for name, (o, w) in col_off.items():
        assert o + w <= out_pad, f"head {name} overflows packed output"
        assert not claimed[o:o + w].any(), f"head {name} overlaps another head"
        claimed[o:o + w] = True

    H = len(mlp_names) * C
    w1 = jnp.zeros((C, H), jnp.float32)
    b1 = jnp.zeros((1, H), jnp.float32)
    w2 = jnp.zeros((H, H), jnp.float32)
    b2 = jnp.zeros((1, H), jnp.float32)
    w3 = jnp.zeros((H, out_pad), jnp.float32)
    wh = jnp.zeros((C, out_pad), jnp.float32)
    b3 = jnp.zeros((1, out_pad), jnp.float32)     # padded lanes stay exactly zero

    for i, name in enumerate(mlp_names):
        p = params[name]
        r0 = i * C
        # BN scale folds into the bias-free 1x1-conv weights; shift stays as bias.
        w1 = w1.at[:, r0:r0 + C].set(p['w1'] * p['s1'])
        b1 = b1.at[:, r0:r0 + C].set(p['b1'])
        w2 = w2.at[r0:r0 + C, r0:r0 + C].set(p['w2'] * p['s2'])
        b2 = b2.at[:, r0:r0 + C].set(p['b2'])
        c0, cw = col_off[name]
        w3 = w3.at[r0:r0 + C, c0:c0 + cw].set(p['w3'])
        b3 = b3.at[:, c0:c0 + cw].set(p['b3'])

    if heading:
        c0, cw = col_off['heading']
        wh = wh.at[:, c0:c0 + cw].set(params['heading']['w'])
        b3 = b3.at[:, c0:c0 + cw].set(params['heading']['b'])

    return dict(
        w1=w1.astype(compute_dtype), b1=b1,
        w2=w2.astype(compute_dtype), b2=b2,
        w3=w3.astype(compute_dtype), wh=wh.astype(compute_dtype), b3=b3,
        col_off=col_off, out_pad=out_pad, hidden=H, seed_feat_dim=C,
        objectness=objectness, heading=heading,
        compute_sem_scores=compute_sem_scores, compute_dtype=compute_dtype)


# ----------------------------- ragged host-side gather -----------------------

def _compact_ragged(entries):
    """One combined device_get + numpy ragged compaction for all queued entries."""
    host = jax.device_get([(e['bbox'], e['mask'], e['heading']) for e in entries])
    for e, (bbox_np, mask_np, heading_np) in zip(entries, host):
        bbox_np = np.asarray(bbox_np)
        keep = ~np.asarray(mask_np).astype(bool)
        B = bbox_np.shape[0]
        e['bbox_out'].append([bbox_np[b][keep[b]] for b in range(B)])
        if heading_np is not None:
            heading_np = np.asarray(heading_np)
            e['cls_out'].append([heading_np[b][keep[b]] for b in range(B)])
        else:
            # Contract change vs PyTorch: the original module would raise here
            # (heading_scores undefined when heading=False); we append Nones.
            e['cls_out'].append([None] * B)


def finalize_ragged_predictions(pending):
    """Resolve all deferred ragged gathers with a single host synchronisation."""
    if pending:
        _compact_ragged(pending)
        pending.clear()


# ----------------------------- forward (module semantics) --------------------

def cls_agnostic_predict_head(bbox_preds, cls_preds, mask, features, base_xyz,
                              end_points, packed, *, prefix='', pending=None):
    """features: (B, C, num_proposal) as in PyTorch.  Returns (center, pred_size).

    If `pending` (a list) is supplied, the blocking host round-trip for the ragged
    bbox[b][~mask[b]] gather is deferred; call finalize_ragged_predictions(pending)
    once after all device work has been dispatched.  pending=None reproduces the
    eager per-call behaviour of the PyTorch module.
    """
    B, C, N = features.shape

    # NCW -> (B*N, C): channels on the 128-lane axis so every 1x1 Conv1d is one MXU
    # matmul; batch flattened into rows for the tiled grid.  Cast BEFORE the
    # transpose so the XLA relayout moves bf16 (half the bytes) instead of f32.
    x = jnp.transpose(features.astype(packed['compute_dtype']), (0, 2, 1))
    x = x.reshape(B * N, C)

    out = fused_heads(x, packed).reshape(B, N, packed['out_pad'])   # (B, N, OUT_PAD) f32

    def head(name):
        o, w = packed['col_off'][name]
        return out[..., o:o + w]

    if packed['objectness']:
        end_points[f'{prefix}objectness_scores'] = head('objectness')[..., 0]

    center = base_xyz + head('center')               # center = base_xyz + residual

    heading_scores = None
    if packed['heading']:
        heading_scores = head('heading')
        end_points[f'{prefix}heading_scores'] = heading_scores

    pred_size = head('size')

    end_points[f'{prefix}base_xyz'] = base_xyz
    end_points[f'{prefix}center'] = center
    end_points[f'{prefix}pred_size'] = pred_size
    if packed['compute_sem_scores']:
        end_points[f'{prefix}sem_cls_scores'] = head('sem')

    bbox = jnp.concatenate([center, pred_size], axis=-1)            # (B, N, 6)

    # TODO(synk): the ragged boolean gather bbox[b][~mask[b]] has a data-dependent
    # output shape -> no fixed-shape Pallas/JAX equivalent; it must go through the
    # host.  Queue device handles here and compact them later in ONE combined
    # device_get so the sync never sits on the dispatch hot path.
    entry = dict(bbox=bbox, mask=mask, heading=heading_scores,
                 bbox_out=bbox_preds, cls_out=cls_preds)
    if pending is None:
        _compact_ragged([entry])
    else:
        pending.append(entry)

    return center, pred_size


# ----------------------------- demo ------------------------------------------

if __name__ == "__main__":
    key = jax.random.PRNGKey(0)
    B, C, N = 2, 32, 16                      # batch, seed_feat_dim, num_proposal
    num_class, num_heading_bin = 4, 4

    (k_feat, k_xyz, k_mask, k_obj, k_ctr, k_head, k_size, k_sem) = jax.random.split(key, 8)

    features = jax.random.normal(k_feat, (B, C, N), dtype=jnp.float32)   # PyTorch NCW
    base_xyz = jax.random.normal(k_xyz, (B, N, 3), dtype=jnp.float32)
    mask = jax.random.bernoulli(k_mask, 0.3, (B, N))                     # bool (B, N)

    raw_params = dict(
        objectness=init_three_layer_mlp(k_obj, C, 1),
        center=init_three_layer_mlp(k_ctr, C, 3),
        heading=init_conv1x1(k_head, C, num_heading_bin),
        size=init_three_layer_mlp(k_size, C, 3),
        sem=init_three_layer_mlp(k_sem, C, num_class),
    )
    packed = pack_head_params(raw_params, C)

    pending, end_points, bbox_preds, cls_preds = [], {}, [], []
    center, pred_size = cls_agnostic_predict_head(
        bbox_preds, cls_preds, mask, features, base_xyz, end_points, packed,
        pending=pending)
    jax.block_until_ready((center, pred_size) + tuple(end_points.values()))
    finalize_ragged_predictions(pending)     # single host sync, off the hot path

    # --- shape checks ---
    assert center.shape == (B, N, 3) and pred_size.shape == (B, N, 3)
    assert end_points['objectness_scores'].shape == (B, N)
    assert end_points['heading_scores'].shape == (B, N, num_heading_bin)
    assert end_points['sem_cls_scores'].shape == (B, N, num_class)
    assert len(bbox_preds[0]) == B and len(cls_preds[0]) == B
    keep_np = ~np.asarray(jax.device_get(mask)).astype(bool)
    for b in range(B):
        assert bbox_preds[0][b].shape == (int(keep_np[b].sum()), 6)
        assert cls_preds[0][b].shape == (int(keep_np[b].sum()), num_heading_bin)

    # --- numeric check vs pure-JAX f32 reference (tolerance covers bf16 matmuls) ---
    xr = jnp.transpose(features, (0, 2, 1))

    def ref_mlp(p):
        h = jnp.maximum((xr @ p['w1']) * p['s1'] + p['b1'], 0.0)
        h = jnp.maximum((h @ p['w2']) * p['s2'] + p['b2'], 0.0)
        return h @ p['w3'] + p['b3']

    tol = dict(atol=5e-2, rtol=5e-2)
    np.testing.assert_allclose(
        np.asarray(center), np.asarray(base_xyz + ref_mlp(raw_params['center'])), **tol)
    np.testing.assert_allclose(
        np.asarray(pred_size), np.asarray(ref_mlp(raw_params['size'])), **tol)
    np.testing.assert_allclose(
        np.asarray(end_points['objectness_scores']),
        np.asarray(ref_mlp(raw_params['objectness'])[..., 0]), **tol)
    np.testing.assert_allclose(
        np.asarray(end_points['heading_scores']),
        np.asarray(xr @ raw_params['heading']['w'] + raw_params['heading']['b']), **tol)
    np.testing.assert_allclose(
        np.asarray(end_points['sem_cls_scores']),
        np.asarray(ref_mlp(raw_params['sem'])), **tol)

    print("KERNEL_OK")
</pallas_src>

<mosaic_0001>
module attributes {stable_mosaic.version = 11 : i64} {
  func.func @_fused_heads_kernel(%arg0: i32, %arg1: memref<32x32xbf16, #tpu.memory_space<vmem>>, %arg2: memref<32x128xbf16, #tpu.memory_space<vmem>>, %arg3: memref<1x128xf32, #tpu.memory_space<vmem>>, %arg4: memref<128x128xbf16, #tpu.memory_space<vmem>>, %arg5: memref<1x128xf32, #tpu.memory_space<vmem>>, %arg6: memref<128x128xbf16, #tpu.memory_space<vmem>>, %arg7: memref<32x128xbf16, #tpu.memory_space<vmem>>, %arg8: memref<1x128xf32, #tpu.memory_space<vmem>>, %arg9: memref<32x128xf32, #tpu.memory_space<vmem>>) attributes {dimension_semantics = [#tpu.dimension_semantics<parallel>], iteration_bounds = array<i64: 1>, scalar_prefetch = 0 : i64, scratch_operands = 0 : i64, tpu.core_type = #tpu.core_type<tc>, window_params = [{transform_indices = @transform_0, window_bounds = array<i64: 32, 32>}, {pipeline_mode = #tpu.pipeline_mode<synchronous>, transform_indices = @transform_1, window_bounds = array<i64: 32, 128>}, {pipeline_mode = #tpu.pipeline_mode<synchronous>, transform_indices = @transform_2, window_bounds = array<i64: 1, 128>}, {pipeline_mode = #tpu.pipeline_mode<synchronous>, transform_indices = @transform_3, window_bounds = array<i64: 128, 128>}, {pipeline_mode = #tpu.pipeline_mode<synchronous>, transform_indices = @transform_4, window_bounds = array<i64: 1, 128>}, {pipeline_mode = #tpu.pipeline_mode<synchronous>, transform_indices = @transform_5, window_bounds = array<i64: 128, 128>}, {pipeline_mode = #tpu.pipeline_mode<synchronous>, transform_indices = @transform_6, window_bounds = array<i64: 32, 128>}, {pipeline_mode = #tpu.pipeline_mode<synchronous>, transform_indices = @transform_7, window_bounds = array<i64: 1, 128>}, {transform_indices = @transform_8, window_bounds = array<i64: 32, 128>}]} {
    %c0 = arith.constant 0 : index
    %c0_0 = arith.constant 0 : index
    %0 = vector.load %arg1[%c0, %c0_0] : memref<32x32xbf16, #tpu.memory_space<vmem>>, vector<32x32xbf16>
    %c0_1 = arith.constant 0 : index
    %c0_2 = arith.constant 0 : index
    %1 = vector.load %arg2[%c0_1, %c0_2] : memref<32x128xbf16, #tpu.memory_space<vmem>>, vector<32x128xbf16>
    %cst = arith.constant dense<0.000000e+00> : vector<32x128xf32>
    %2 = tpu.matmul %0, %1, %cst {dimension_numbers = #tpu.dot_dimension_numbers<[1], [0], [0], [1], [0, 0, 1, 1], [], []>} : vector<32x32xbf16>, vector<32x128xbf16>, vector<32x128xf32> -> vector<32x128xf32>
    %c0_3 = arith.constant 0 : index
    %c0_4 = arith.constant 0 : index
    %3 = vector.load %arg3[%c0_3, %c0_4] : memref<1x128xf32, #tpu.memory_space<vmem>>, vector<1x128xf32>
    %4 = vector.broadcast %3 : vector<1x128xf32> to vector<32x128xf32>
    %5 = arith.addf %2, %4 : vector<32x128xf32>
    %cst_5 = arith.constant 0.000000e+00 : f32
    %6 = vector.broadcast %cst_5 : f32 to vector<32x128xf32>
    %7 = arith.maximumf %5, %6 : vector<32x128xf32>
    %8 = arith.truncf %7 : vector<32x128xf32> to vector<32x128xbf16>
    %c0_6 = arith.constant 0 : index
    %c0_7 = arith.constant 0 : index
    %9 = vector.load %arg4[%c0_6, %c0_7] : memref<128x128xbf16, #tpu.memory_space<vmem>>, vector<128x128xbf16>
    %cst_8 = arith.constant dense<0.000000e+00> : vector<32x128xf32>
    %10 = tpu.matmul %8, %9, %cst_8 {dimension_numbers = #tpu.dot_dimension_numbers<[1], [0], [0], [1], [0, 0, 1, 1], [], []>} : vector<32x128xbf16>, vector<128x128xbf16>, vector<32x128xf32> -> vector<32x128xf32>
    %c0_9 = arith.constant 0 : index
    %c0_10 = arith.constant 0 : index
    %11 = vector.load %arg5[%c0_9, %c0_10] : memref<1x128xf32, #tpu.memory_space<vmem>>, vector<1x128xf32>
    %12 = vector.broadcast %11 : vector<1x128xf32> to vector<32x128xf32>
    %13 = arith.addf %10, %12 : vector<32x128xf32>
    %cst_11 = arith.constant 0.000000e+00 : f32
    %14 = vector.broadcast %cst_11 : f32 to vector<32x128xf32>
    %15 = arith.maximumf %13, %14 : vector<32x128xf32>
    %16 = arith.truncf %15 : vector<32x128xf32> to vector<32x128xbf16>
    %c0_12 = arith.constant 0 : index
    %c0_13 = arith.constant 0 : index
    %17 = vector.load %arg6[%c0_12, %c0_13] : memref<128x128xbf16, #tpu.memory_space<vmem>>, vector<128x128xbf16>
    %cst_14 = arith.constant dense<0.000000e+00> : vector<32x128xf32>
    %18 = tpu.matmul %16, %17, %cst_14 {dimension_numbers = #tpu.dot_dimension_numbers<[1], [0], [0], [1], [0, 0, 1, 1], [], []>} : vector<32x128xbf16>, vector<128x128xbf16>, vector<32x128xf32> -> vector<32x128xf32>
    %c0_15 = arith.constant 0 : index
    %c0_16 = arith.constant 0 : index
    %19 = vector.load %arg7[%c0_15, %c0_16] : memref<32x128xbf16, #tpu.memory_space<vmem>>, vector<32x128xbf16>
    %cst_17 = arith.constant dense<0.000000e+00> : vector<32x128xf32>
    %20 = tpu.matmul %0, %19, %cst_17 {dimension_numbers = #tpu.dot_dimension_numbers<[1], [0], [0], [1], [0, 0, 1, 1], [], []>} : vector<32x32xbf16>, vector<32x128xbf16>, vector<32x128xf32> -> vector<32x128xf32>
    %21 = arith.addf %18, %20 : vector<32x128xf32>
    %c0_18 = arith.constant 0 : index
    %c0_19 = arith.constant 0 : index
    %22 = vector.load %arg8[%c0_18, %c0_19] : memref<1x128xf32, #tpu.memory_space<vmem>>, vector<1x128xf32>
    %23 = vector.broadcast %22 : vector<1x128xf32> to vector<32x128xf32>
    %24 = arith.addf %21, %23 : vector<32x128xf32>
    %c0_20 = arith.constant 0 : index
    %c0_21 = arith.constant 0 : index
    %25 = vector.load %arg9[%c0_20, %c0_21] : memref<32x128xf32, #tpu.memory_space<vmem>>, vector<32x128xf32>
    tpu.vector_store %arg9[%c0_20, %c0_21], %24 {strides = array<i32>} : memref<32x128xf32, #tpu.memory_space<vmem>>, vector<32x128xf32>,
    return
  }
  func.func @transform_0(%arg0: i32) -> (i32, i32) {
    %c0_i32 = arith.constant 0 : i32
    %c0_i32_0 = arith.constant 0 : i32
    return %arg0, %c0_i32 : i32, i32
  }
  func.func @transform_1(%arg0: i32) -> (i32, i32) {
    %c0_i32 = arith.constant 0 : i32
    %c0_i32_0 = arith.constant 0 : i32
    %c0_i32_1 = arith.constant 0 : i32
    return %c0_i32, %c0_i32_0 : i32, i32
  }
  func.func @transform_2(%arg0: i32) -> (i32, i32) {
    %c0_i32 = arith.constant 0 : i32
    %c0_i32_0 = arith.constant 0 : i32
    %c0_i32_1 = arith.constant 0 : i32
    return %c0_i32, %c0_i32_0 : i32, i32
  }
  func.func @transform_3(%arg0: i32) -> (i32, i32) {
    %c0_i32 = arith.constant 0 : i32
    %c0_i32_0 = arith.constant 0 : i32
    %c0_i32_1 = arith.constant 0 : i32
    return %c0_i32, %c0_i32_0 : i32, i32
  }
  func.func @transform_4(%arg0: i32) -> (i32, i32) {
    %c0_i32 = arith.constant 0 : i32
    %c0_i32_0 = arith.constant 0 : i32
    %c0_i32_1 = arith.constant 0 : i32
    return %c0_i32, %c0_i32_0 : i32, i32
  }
  func.func @transform_5(%arg0: i32) -> (i32, i32) {
    %c0_i32 = arith.constant 0 : i32
    %c0_i32_0 = arith.constant 0 : i32
    %c0_i32_1 = arith.constant 0 : i32
    return %c0_i32, %c0_i32_0 : i32, i32
  }
  func.func @transform_6(%arg0: i32) -> (i32, i32) {
    %c0_i32 = arith.constant 0 : i32
    %c0_i32_0 = arith.constant 0 : i32
    %c0_i32_1 = arith.constant 0 : i32
    return %c0_i32, %c0_i32_0 : i32, i32
  }
  func.func @transform_7(%arg0: i32) -> (i32, i32) {
    %c0_i32 = arith.constant 0 : i32
    %c0_i32_0 = arith.constant 0 : i32
    %c0_i32_1 = arith.constant 0 : i32
    return %c0_i32, %c0_i32_0 : i32, i32
  }
  func.func @transform_8(%arg0: i32) -> (i32, i32) {
    %c0_i32 = arith.constant 0 : i32
    %c0_i32_0 = arith.constant 0 : i32
    return %arg0, %c0_i32 : i32, i32
  }
}

</mosaic_0001>

<llo_original>
// kernel: tpu_custom_call.1
$region0: #{tpu_custom_call.1}
  #allocation0 [shape = 'u32[]', space=smem, size = 0x4, offset = 0x4, fixed_abs, tag = 'smem constant byte address 0x4 - core index']
  #allocation1 [shape = 'u32[144,128]{1,0:T(1,128)}', space=vmem, size = 0x12000, scoped, tag = 'internal scratch']
  %s0 = inlined_call_operand.hbm [shape: bf16[32,32], index: 0, kind: input, shape index: {}]
  %s1 = inlined_call_operand.hbm [shape: bf16[32,128], index: 1, kind: input, shape index: {}]
  %s2 = inlined_call_operand.vmem [shape: f32[1,128], index: 2, kind: input, shape index: {}]
  %s3 = inlined_call_operand.hbm [shape: bf16[128,128], index: 3, kind: input, shape index: {}]
  %s4 = inlined_call_operand.vmem [shape: f32[1,128], index: 4, kind: input, shape index: {}]
  %s5 = inlined_call_operand.hbm [shape: bf16[128,128], index: 5, kind: input, shape index: {}]
  %s6 = inlined_call_operand.vmem [shape: bf16[32,128], index: 6, kind: input, shape index: {}]
  %s7 = inlined_call_operand.vmem [shape: f32[1,128], index: 7, kind: input, shape index: {}]
  %s8 = inlined_call_operand.hbm [shape: f32[32,128], index: 8, kind: output, shape index: {}]
  %s9 = sld [smem:[#allocation0]]
  $region58: #{tpu_custom_call.1} parent=0
    _
  %s11 = ssub.s32 1, %s9
  %s12 = scalar_select 0, %s11, %s9
  $region1: #{tpu_custom_call.1} parent=0
    #allocation2 [shape = 'u8[8192]{0}', space=vmem, size = 0x2000, scoped, tag = 'input window, operand 0, single buffered']
    #allocation3 [shape = 's32[1]{0}', space=sflag, size = 0x4, scoped, tag = 'scoped memory for tpu_custom_call.1']
    #allocation4 [shape = 's32[1]{0}', space=sflag, size = 0x4, scoped, tag = 'scoped memory for tpu_custom_call.1']
    #allocation5 [shape = 'u8[8192]{0}', space=vmem, size = 0x2000, scoped, tag = 'input window, operand 1, single buffered']
    #allocation6 [shape = 's32[1]{0}', space=sflag, size = 0x4, scoped, tag = 'scoped memory for tpu_custom_call.1']
    #allocation7 [shape = 'u8[32768]{0}', space=vmem, size = 0x8000, scoped, tag = 'input window, operand 3, single buffered']
    #allocation8 [shape = 'u8[32768]{0}', space=vmem, size = 0x8000, scoped, tag = 'input window, operand 5, single buffered']
    #allocation9 [shape = 's32[1]{0}', space=sflag, size = 0x4, scoped, tag = 'scoped memory for tpu_custom_call.1']
    #allocation10 [shape = 'u8[16384]{0}', space=vmem, size = 0x4000, scoped, tag = 'output window, operand 0, single buffered']
    %13 = vsyncpa [#allocation3], 0
    %14 = vsyncpa [#allocation6], 0
    %15 = vsyncpa [#allocation9], 0
    %16 = vsyncpa [#allocation4], 0
    // Predicated region
    $region2: #{tpu_custom_call.1} parent=1 // pred_check
      _
    $region3: #{tpu_custom_call.1} parent=1 // pred_check_branch
      %18 = sbr.rel (0) target = $region5
    $region4: #{tpu_custom_call.1} parent=1 // pred_region
      %s20 = ssub.s32 256, 256
      %21 = vsyncadd [#allocation3], %s20
      %s22 = sshll.u32 [#allocation2], 4
      %s23 = int_to_ptr.vmem [resolvable:$true] %s22
      %28 = dma.hbm_to_vmem [thread:$0]  %s0, 256, %s23, [#allocation3], 64, 64, 4
    $region5: #{tpu_custom_call.1} parent=1 // pred_fallthru
      _
    // Predicated region
    $region6: #{tpu_custom_call.1} parent=1 // pred_check
      _
    $region7: #{tpu_custom_call.1} parent=1 // pred_check_branch
      %30 = sbr.rel (0) target = $region9
    $region8: #{tpu_custom_call.1} parent=1 // pred_region
      %s32 = ssub.s32 256, 256
      %33 = vsyncadd [#allocation6], %s32
      %s34 = sshll.u32 [#allocation5], 4
      %s35 = int_to_ptr.vmem [resolvable:$true] %s34
      %40 = dma.hbm_to_vmem [thread:$0]  %s1, 256, %s35, [#allocation6], 64, 64, 4
    $region9: #{tpu_custom_call.1} parent=1 // pred_fallthru
      _
    // Predicated region
    $region10: #{tpu_custom_call.1} parent=1 // pred_check
      _
    $region11: #{tpu_custom_call.1} parent=1 // pred_check_branch
      %42 = sbr.rel (0) target = $region13
    $region12: #{tpu_custom_call.1} parent=1 // pred_region
      _
    $region13: #{tpu_custom_call.1} parent=1 // pred_fallthru
      _
    // Predicated region
    $region14: #{tpu_custom_call.1} parent=1 // pred_check
      _
    $region15: #{tpu_custom_call.1} parent=1 // pred_check_branch
      %44 = sbr.rel (0) target = $region17
    $region16: #{tpu_custom_call.1} parent=1 // pred_region
      %s46 = ssub.s32 1024, 1024
      %47 = vsyncadd [#allocation6], %s46
      %s48 = sshll.u32 [#allocation7], 4
      %s49 = int_to_ptr.vmem [resolvable:$true] %s48
      %54 = dma.hbm_to_vmem [thread:$0]  %s3, 1024, %s49, [#allocation6], 64, 64, 4
    $region17: #{tpu_custom_call.1} parent=1 // pred_fallthru
      _
    // Predicated region
    $region18: #{tpu_custom_call.1} parent=1 // pred_check
      _
    $region19: #{tpu_custom_call.1} parent=1 // pred_check_branch
      %56 = sbr.rel (0) target = $region21
    $region20: #{tpu_custom_call.1} parent=1 // pred_region
      _
    $region21: #{tpu_custom_call.1} parent=1 // pred_fallthru
      _
    // Predicated region
    $region22: #{tpu_custom_call.1} parent=1 // pred_check
      _
    $region23: #{tpu_custom_call.1} parent=1 // pred_check_branch
      %58 = sbr.rel (0) target = $region25
    $region24: #{tpu_custom_call.1} parent=1 // pred_region
      %s60 = ssub.s32 1024, 1024
      %61 = vsyncadd [#allocation9], %s60
      %s62 = sshll.u32 [#allocation8], 4
      %s63 = int_to_ptr.vmem [resolvable:$true] %s62
      %68 = dma.hbm_to_vmem [thread:$0]  %s5, 1024, %s63, [#allocation9], 64, 64, 4
    $region25: #{tpu_custom_call.1} parent=1 // pred_fallthru
      _
    // Predicated region
    $region26: #{tpu_custom_call.1} parent=1 // pred_check
      _
    $region27: #{tpu_custom_call.1} parent=1 // pred_check_branch
      %70 = sbr.rel (0) target = $region29
    $region28: #{tpu_custom_call.1} parent=1 // pred_region
      _
    $region29: #{tpu_custom_call.1} parent=1 // pred_fallthru
      _
    // Predicated region
    $region30: #{tpu_custom_call.1} parent=1 // pred_check
      _
    $region31: #{tpu_custom_call.1} parent=1 // pred_check_branch
      %72 = sbr.rel (0) target = $region33
    $region32: #{tpu_custom_call.1} parent=1 // pred_region
      _
    $region33: #{tpu_custom_call.1} parent=1 // pred_fallthru
      _
    // Predicated region
    $region34: #{tpu_custom_call.1} parent=1 // pred_check
      _
    $region35: #{tpu_custom_call.1} parent=1 // pred_check_branch
      %74 = sbr.rel (0) target = $region37
    $region36: #{tpu_custom_call.1} parent=1 // pred_region
      %75 = dma.done [#allocation3], 256
    $region37: #{tpu_custom_call.1} parent=1 // pred_fallthru
      _
    // Predicated region
    $region38: #{tpu_custom_call.1} parent=1 // pred_check
      _
    $region39: #{tpu_custom_call.1} parent=1 // pred_check_branch
      %77 = sbr.rel (0) target = $region41
    $region40: #{tpu_custom_call.1} parent=1 // pred_region
      %78 = dma.done [#allocation6], 256
    $region41: #{tpu_custom_call.1} parent=1 // pred_fallthru
      _
    // Predicated region
    $region42: #{tpu_custom_call.1} parent=1 // pred_check
      _
    $region43: #{tpu_custom_call.1} parent=1 // pred_check_branch
      %80 = sbr.rel (0) target = $region45
    $region44: #{tpu_custom_call.1} parent=1 // pred_region
      %81 = dma.done [#allocation6], 1024
    $region45: #{tpu_custom_call.1} parent=1 // pred_fallthru
      _
    // Predicated region
    $region46: #{tpu_custom_call.1} parent=1 // pred_check
      _
    $region47: #{tpu_custom_call.1} parent=1 // pred_check_branch
      %83 = sbr.rel (0) target = $region49
    $region48: #{tpu_custom_call.1} parent=1 // pred_region
      %84 = dma.done [#allocation9], 1024
    $region49: #{tpu_custom_call.1} parent=1 // pred_fallthru
      _
    %v86 = vld [vmem:[#allocation2] sm:$0xf]
    %v87 = vld [vmem:[#allocation2 + $0x4] sm:$0xf]
    %v88 = vld [vmem:[#allocation2 + $0x8] sm:$0xf]
    %v89 = vld [vmem:[#allocation2 + $0xc] sm:$0xf]
    %v90 = vld [vmem:[#allocation5] sm:$0xf]
    %v91 = vld [vmem:[#allocation5 + $0x4] sm:$0xf]
    %v92 = vld [vmem:[#allocation5 + $0x8] sm:$0xf]
    %v93 = vld [vmem:[#allocation5 + $0xc] sm:$0xf]
    %v94 = vld [vmem:[%s2] sm:$0x1]
    %v96 = vlaneseq
    %v97 = vshrl.u32 %v96, 7
    %v98 = vsub.s32 0, %v97
    %v99 = vrot.slane %v94, %v98
    %v105 = vunpack.c.l.b16 %v86
    %v106 = vunpack.c.l.b16 %v87
    %v107 = vunpack.c.l.b16 %v88
    %v108 = vunpack.c.l.b16 %v89
    %v109 = vpack.c.b16 %v106, %v105
    %v110 = vpack.c.b16 %v108, %v107
    %v115 = vunpack.c.l.b16 %v90
    %v116 = vunpack.c.l.b16 %v91
    %v117 = vunpack.c.l.b16 %v92
    %v118 = vunpack.c.l.b16 %v93
    %v119 = vpack.c.b16 %v116, %v115
    %v120 = vpack.c.b16 %v118, %v117
    %vm123 = vcmask 261120
    %v125 = vsel %vm123, %v109, 0
    %v128 = vsel %vm123, %v110, 0
    %130 = vmatprep.subr.bf16.mxu0 0
    %131 = vmatpush1.bf16.msra.mxu0 %v119
    %132 = vmatprep.subr.bf16.mxu0 0
    %133 = vmatpush1.bf16.msra.mxu0 %v120
    %134 = vmatprep.subr.bf16.mxu0 0
    %135 = vmatpush1.bf16.msra.mxu0 0
    %136 = vmatprep.subr.bf16.mxu0 0
    %137 = vmatpush1.bf16.msra.mxu0 0
    %138 = vmatprep.subr.bf16.mxu0 0
    %139 = vmatpush1.bf16.msra.mxu0 0
    %140 = vmatprep.subr.bf16.mxu0 0
    %141 = vmatpush1.bf16.msra.mxu0 0
    %142 = vmatprep.subr.bf16.mxu0 0
    %143 = vmatpush1.bf16.msra.mxu0 0
    %144 = vmatprep.subr.bf16.mxu0 0
    %145 = vmatpush1.bf16.msra.mxu0 0
    %146 = vmatprep.subr.bf16.mxu0 0
    %147 = vmatpush1.bf16.msra.mxu0 0
    %148 = vmatprep.subr.bf16.mxu0 0
    %149 = vmatpush1.bf16.msra.mxu0 0
    %150 = vmatprep.subr.bf16.mxu0 0
    %151 = vmatpush1.bf16.msra.mxu0 0
    %152 = vmatprep.subr.bf16.mxu0 0
    %153 = vmatpush1.bf16.msra.mxu0 0
    %154 = vmatprep.subr.bf16.mxu0 0
    %155 = vmatpush1.bf16.msra.mxu0 0
    %156 = vmatprep.subr.bf16.mxu0 0
    %157 = vmatpush1.bf16.msra.mxu0 0
    %158 = vmatprep.subr.bf16.mxu0 0
    %159 = vmatpush1.bf16.msra.mxu0 0
    %160 = vmatprep.subr.bf16.mxu0 0
    %161 = vmatpush1.bf16.msra.mxu0 0
    %162 = vmatprep.mubr.bf16.mxu0 0
    %163 = vmatmul.mubr.bf16.gmra.mrb[0].mxu0 %v125
    %v164 = vpop.f32.mrb[0].mxu0
    %v165 = vadd.f32 %v99, %v164
    %v166 = vpop.f32.mrb[0].mxu0
    %v167 = vpop.f32.mrb[0].mxu0
    %v168 = vadd.f32 %v99, %v167
    %v169 = vpop.f32.mrb[0].mxu0
    %170 = vmatprep.mubr.bf16.mxu0 0
    %171 = vmatmul.mubr.bf16.gmra.mrb[0].mxu0 %v128
    %v172 = vpop.f32.mrb[0].mxu0
    %v173 = vadd.f32 %v99, %v172
    %v174 = vpop.f32.mrb[0].mxu0
    %v175 = vpop.f32.mrb[0].mxu0
    %v176 = vadd.f32 %v99, %v175
    %v177 = vpop.f32.mrb[0].mxu0
    %178 = vdwg.mxu0
    %v179 = vmax.f32 %v165, 0.0
    %v180 = vmax.f32 %v168, 0.0
    %v181 = vmax.f32 %v173, 0.0
    %v182 = vmax.f32 %v176, 0.0
    %v183 = vpack.c.bf16 %v180, %v179
    %v184 = vpack.c.bf16 %v182, %v181
    %v185 = vld [vmem:[#allocation7] sm:$0xf]
    %v186 = vld [vmem:[#allocation7 + $0x4] sm:$0xf]
    %v187 = vld [vmem:[#allocation7 + $0x8] sm:$0xf]
    %v188 = vld [vmem:[#allocation7 + $0xc] sm:$0xf]
    %v189 = vld [vmem:[#allocation7 + $0x10] sm:$0xf]
    %v190 = vld [vmem:[#allocation7 + $0x14] sm:$0xf]
    %v191 = vld [vmem:[#allocation7 + $0x18] sm:$0xf]
    %v192 = vld [vmem:[#allocation7 + $0x1c] sm:$0xf]
    %v193 = vld [vmem:[#allocation7 + $0x20] sm:$0xf]
    %v194 = vld [vmem:[#allocation7 + $0x24] sm:$0xf]
    %v195 = vld [vmem:[#allocation7 + $0x28] sm:$0xf]
    %v196 = vld [vmem:[#allocation7 + $0x2c] sm:$0xf]
    %v197 = vld [vmem:[#allocation7 + $0x30] sm:$0xf]
    %v198 = vld [vmem:[#allocation7 + $0x34] sm:$0xf]
    %v199 = vld [vmem:[#allocation7 + $0x38] sm:$0xf]
    %v200 = vld [vmem:[#allocation7 + $0x3c] sm:$0xf]
    %v201 = vld [vmem:[%s4] sm:$0x1]
    %v203 = vlaneseq
    %v204 = vshrl.u32 %v203, 7
    %v205 = vsub.s32 0, %v204
    %v206 = vrot.slane %v201, %v205
    %v224 = vunpack.c.l.b16 %v185
    %v225 = vunpack.c.l.b16 %v186
    %v226 = vunpack.c.l.b16 %v187
    %v227 = vunpack.c.l.b16 %v188
    %v228 = vunpack.c.l.b16 %v189
    %v229 = vunpack.c.l.b16 %v190
    %v230 = vunpack.c.l.b16 %v191
    %v231 = vunpack.c.l.b16 %v192
    %v232 = vunpack.c.l.b16 %v193
    %v233 = vunpack.c.l.b16 %v194
    %v234 = vunpack.c.l.b16 %v195
    %v235 = vunpack.c.l.b16 %v196
    %v236 = vunpack.c.l.b16 %v197
    %v237 = vunpack.c.l.b16 %v198
    %v238 = vunpack.c.l.b16 %v199
    %v239 = vunpack.c.l.b16 %v200
    %v240 = vpack.c.b16 %v225, %v224
    %v241 = vpack.c.b16 %v227, %v226
    %v242 = vpack.c.b16 %v229, %v228
    %v243 = vpack.c.b16 %v231, %v230
    %v244 = vpack.c.b16 %v233, %v232
    %v245 = vpack.c.b16 %v235, %v234
    %v246 = vpack.c.b16 %v237, %v236
    %v247 = vpack.c.b16 %v239, %v238
    %256 = vmatprep.subr.bf16.mxu0 0
    %257 = vmatpush1.bf16.msra.mxu0 %v240
    %258 = vmatprep.subr.bf16.mxu0 0
    %259 = vmatpush1.bf16.msra.mxu0 %v241
    %260 = vmatprep.subr.bf16.mxu0 0
    %261 = vmatpush1.bf16.msra.mxu0 %v242
    %262 = vmatprep.subr.bf16.mxu0 0
    %263 = vmatpush1.bf16.msra.mxu0 %v243
    %264 = vmatprep.subr.bf16.mxu0 0
    %265 = vmatpush1.bf16.msra.mxu0 %v244
    %266 = vmatprep.subr.bf16.mxu0 0
    %267 = vmatpush1.bf16.msra.mxu0 %v245
    %268 = vmatprep.subr.bf16.mxu0 0
    %269 = vmatpush1.bf16.msra.mxu0 %v246
    %270 = vmatprep.subr.bf16.mxu0 0
    %271 = vmatpush1.bf16.msra.mxu0 %v247
    %272 = vmatprep.subr.bf16.mxu0 0
    %273 = vmatpush1.bf16.msra.mxu0 0
    %274 = vmatprep.subr.bf16.mxu0 0
    %275 = vmatpush1.bf16.msra.mxu0 0
    %276 = vmatprep.subr.bf16.mxu0 0
    %277 = vmatpush1.bf16.msra.mxu0 0
    %278 = vmatprep.subr.bf16.mxu0 0
    %279 = vmatpush1.bf16.msra.mxu0 0
    %280 = vmatprep.subr.bf16.mxu0 0
    %281 = vmatpush1.bf16.msra.mxu0 0
    %282 = vmatprep.subr.bf16.mxu0 0
    %283 = vmatpush1.bf16.msra.mxu0 0
    %284 = vmatprep.subr.bf16.mxu0 0
    %285 = vmatpush1.bf16.msra.mxu0 0
    %286 = vmatprep.subr.bf16.mxu0 0
    %287 = vmatpush1.bf16.msra.mxu0 0
    %288 = vmatprep.mubr.bf16.mxu0 0
    %289 = vmatmul.mubr.bf16.gmra.mrb[0].mxu0 %v183
    %v290 = vpop.f32.mrb[0].mxu0
    %v291 = vadd.f32 %v206, %v290
    %v292 = vpop.f32.mrb[0].mxu0
    %v293 = vpop.f32.mrb[0].mxu0
    %v294 = vadd.f32 %v206, %v293
    %v295 = vpop.f32.mrb[0].mxu0
    %296 = vmatprep.mubr.bf16.mxu0 0
    %297 = vmatmul.mubr.bf16.gmra.mrb[0].mxu0 %v184
    %v298 = vpop.f32.mrb[0].mxu0
    %v299 = vadd.f32 %v206, %v298
    %v300 = vpop.f32.mrb[0].mxu0
    %v301 = vpop.f32.mrb[0].mxu0
    %v302 = vadd.f32 %v206, %v301
    %v303 = vpop.f32.mrb[0].mxu0
    %304 = vdwg.mxu0
    %v305 = vmax.f32 %v291, 0.0
    %v306 = vmax.f32 %v294, 0.0
    %v307 = vmax.f32 %v299, 0.0
    %v308 = vmax.f32 %v302, 0.0
    %v309 = vpack.c.bf16 %v306, %v305
    %v310 = vpack.c.bf16 %v308, %v307
    %v311 = vld [vmem:[#allocation8] sm:$0xf]
    %v312 = vld [vmem:[#allocation8 + $0x4] sm:$0xf]
    %v313 = vld [vmem:[#allocation8 + $0x8] sm:$0xf]
    %v314 = vld [vmem:[#allocation8 + $0xc] sm:$0xf]
    %v315 = vld [vmem:[#allocation8 + $0x10] sm:$0xf]
    %v316 = vld [vmem:[#allocation8 + $0x14] sm:$0xf]
    %v317 = vld [vmem:[#allocation8 + $0x18] sm:$0xf]
    %v318 = vld [vmem:[#allocation8 + $0x1c] sm:$0xf]
    %v319 = vld [vmem:[#allocation8 + $0x20] sm:$0xf]
    %v320 = vld [vmem:[#allocation8 + $0x24] sm:$0xf]
    %v321 = vld [vmem:[#allocation8 + $0x28] sm:$0xf]
    %v322 = vld [vmem:[#allocation8 + $0x2c] sm:$0xf]
    %v323 = vld [vmem:[#allocation8 + $0x30] sm:$0xf]
    %v324 = vld [vmem:[#allocation8 + $0x34] sm:$0xf]
    %v325 = vld [vmem:[#allocation8 + $0x38] sm:$0xf]
    %v326 = vld [vmem:[#allocation8 + $0x3c] sm:$0xf]
    %v327 = vld [vmem:[%s6] sm:$0xf]
    %v328 = vld [vmem:[%s6 + $0x4] sm:$0xf]
    %v329 = vld [vmem:[%s6 + $0x8] sm:$0xf]
    %v330 = vld [vmem:[%s6 + $0xc] sm:$0xf]
    %v335 = vunpack.c.l.b16 %v327
    %v336 = vunpack.c.l.b16 %v328
    %v337 = vunpack.c.l.b16 %v329
    %v338 = vunpack.c.l.b16 %v330
    %v339 = vpack.c.b16 %v336, %v335
    %v340 = vpack.c.b16 %v338, %v337
    %343 = vmatprep.subr.bf16.mxu0 0
    %344 = vmatpush1.bf16.msra.mxu0 %v339
    %345 = vmatprep.subr.bf16.mxu0 0
    %346 = vmatpush1.bf16.msra.mxu0 %v340
    %347 = vmatprep.subr.bf16.mxu0 0
    %348 = vmatpush1.bf16.msra.mxu0 0
    %349 = vmatprep.subr.bf16.mxu0 0
    %350 = vmatpush1.bf16.msra.mxu0 0
    %351 = vmatprep.subr.bf16.mxu0 0
    %352 = vmatpush1.bf16.msra.mxu0 0
    %353 = vmatprep.subr.bf16.mxu0 0
    %354 = vmatpush1.bf16.msra.mxu0 0
    %355 = vmatprep.subr.bf16.mxu0 0
    %356 = vmatpush1.bf16.msra.mxu0 0
    %357 = vmatprep.subr.bf16.mxu0 0
    %358 = vmatpush1.bf16.msra.mxu0 0
    %359 = vmatprep.subr.bf16.mxu0 0
    %360 = vmatpush1.bf16.msra.mxu0 0
    %361 = vmatprep.subr.bf16.mxu0 0
    %362 = vmatpush1.bf16.msra.mxu0 0
    %363 = vmatprep.subr.bf16.mxu0 0
    %364 = vmatpush1.bf16.msra.mxu0 0
    %365 = vmatprep.subr.bf16.mxu0 0
    %366 = vmatpush1.bf16.msra.mxu0 0
    %367 = vmatprep.subr.bf16.mxu0 0
    %368 = vmatpush1.bf16.msra.mxu0 0
    %369 = vmatprep.subr.bf16.mxu0 0
    %370 = vmatpush1.bf16.msra.mxu0 0
    %371 = vmatprep.subr.bf16.mxu0 0
    %372 = vmatpush1.bf16.msra.mxu0 0
    %373 = vmatprep.subr.bf16.mxu0 0
    %374 = vmatpush1.bf16.msra.mxu0 0
    %375 = vmatprep.mubr.bf16.mxu0 0
    %376 = vmatmul.mubr.bf16.gmra.mrb[0].mxu0 %v125
    %v377 = vpop.f32.mrb[0].mxu0
    %v378 = vadd.f32 0.0, %v377
    %v379 = vpop.f32.mrb[0].mxu0
    %v380 = vpop.f32.mrb[0].mxu0
    %v381 = vadd.f32 0.0, %v380
    %v382 = vpop.f32.mrb[0].mxu0
    %383 = vmatprep.mubr.bf16.mxu0 0
    %384 = vmatmul.mubr.bf16.gmra.mrb[0].mxu0 %v128
    %v385 = vpop.f32.mrb[0].mxu0
    %v386 = vadd.f32 0.0, %v385
    %v387 = vpop.f32.mrb[0].mxu0
    %v388 = vpop.f32.mrb[0].mxu0
    %v389 = vadd.f32 0.0, %v388
    %v390 = vpop.f32.mrb[0].mxu0
    %391 = vdwg.mxu0
    %v408 = vunpack.c.l.b16 %v311
    %v409 = vunpack.c.l.b16 %v312
    %v410 = vunpack.c.l.b16 %v313
    %v411 = vunpack.c.l.b16 %v314
    %v412 = vunpack.c.l.b16 %v315
    %v413 = vunpack.c.l.b16 %v316
    %v414 = vunpack.c.l.b16 %v317
    %v415 = vunpack.c.l.b16 %v318
    %v416 = vunpack.c.l.b16 %v319
    %v417 = vunpack.c.l.b16 %v320
    %v418 = vunpack.c.l.b16 %v321
    %v419 = vunpack.c.l.b16 %v322
    %v420 = vunpack.c.l.b16 %v323
    %v421 = vunpack.c.l.b16 %v324
    %v422 = vunpack.c.l.b16 %v325
    %v423 = vunpack.c.l.b16 %v326
    %v424 = vpack.c.b16 %v409, %v408
    %v425 = vpack.c.b16 %v411, %v410
    %v426 = vpack.c.b16 %v413, %v412
    %v427 = vpack.c.b16 %v415, %v414
    %v428 = vpack.c.b16 %v417, %v416
    %v429 = vpack.c.b16 %v419, %v418
    %v430 = vpack.c.b16 %v421, %v420
    %v431 = vpack.c.b16 %v423, %v422
    %440 = vmatprep.subr.bf16.mxu0 0
    %441 = vmatpush1.bf16.msra.mxu0 %v424
    %442 = vmatprep.subr.bf16.mxu0 0
    %443 = vmatpush1.bf16.msra.mxu0 %v425
    %444 = vmatprep.subr.bf16.mxu0 0
    %445 = vmatpush1.bf16.msra.mxu0 %v426
    %446 = vmatprep.subr.bf16.mxu0 0
    %447 = vmatpush1.bf16.msra.mxu0 %v427
    %448 = vmatprep.subr.bf16.mxu0 0
    %449 = vmatpush1.bf16.msra.mxu0 %v428
    %450 = vmatprep.subr.bf16.mxu0 0
    %451 = vmatpush1.bf16.msra.mxu0 %v429
    %452 = vmatprep.subr.bf16.mxu0 0
    %453 = vmatpush1.bf16.msra.mxu0 %v430
    %454 = vmatprep.subr.bf16.mxu0 0
    %455 = vmatpush1.bf16.msra.mxu0 %v431
    %456 = vmatprep.subr.bf16.mxu0 0
    %457 = vmatpush1.bf16.msra.mxu0 0
    %458 = vmatprep.subr.bf16.mxu0 0
    %459 = vmatpush1.bf16.msra.mxu0 0
    %460 = vmatprep.subr.bf16.mxu0 0
    %461 = vmatpush1.bf16.msra.mxu0 0
    %462 = vmatprep.subr.bf16.mxu0 0
    %463 = vmatpush1.bf16.msra.mxu0 0
    %464 = vmatprep.subr.bf16.mxu0 0
    %465 = vmatpush1.bf16.msra.mxu0 0
    %466 = vmatprep.subr.bf16.mxu0 0
    %467 = vmatpush1.bf16.msra.mxu0 0
    %468 = vmatprep.subr.bf16.mxu0 0
    %469 = vmatpush1.bf16.msra.mxu0 0
    %470 = vmatprep.subr.bf16.mxu0 0
    %471 = vmatpush1.bf16.msra.mxu0 0
    %472 = vmatprep.mubr.bf16.mxu0 0
    %473 = vmatmul.mubr.bf16.gmra.mrb[0].mxu0 %v309
    %v474 = vpop.f32.mrb[0].mxu0
    %v475 = vadd.f32 %v378, %v474
    %v476 = vpop.f32.mrb[0].mxu0
    %v477 = vpop.f32.mrb[0].mxu0
    %v478 = vadd.f32 %v381, %v477
    %v479 = vpop.f32.mrb[0].mxu0
    %480 = vmatprep.mubr.bf16.mxu0 0
    %481 = vmatmul.mubr.bf16.gmra.mrb[0].mxu0 %v310
    %v482 = vpop.f32.mrb[0].mxu0
    %v483 = vadd.f32 %v386, %v482
    %v484 = vpop.f32.mrb[0].mxu0
    %v485 = vpop.f32.mrb[0].mxu0
    %v486 = vadd.f32 %v389, %v485
    %v487 = vpop.f32.mrb[0].mxu0
    %488 = vdwg.mxu0
    %v489 = vld [vmem:[%s7] sm:$0x1]
    %v491 = vlaneseq
    %v492 = vshrl.u32 %v491, 7
    %v493 = vsub.s32 0, %v492
    %v494 = vrot.slane %v489, %v493
    %v496 = vadd.f32 %v475, %v494
    %v497 = vadd.f32 %v478, %v494
    %v498 = vadd.f32 %v483, %v494
    %v499 = vadd.f32 %v486, %v494
    %500 = vst [vmem:[#allocation10] sm:$0xff] %v496
    %501 = vst [vmem:[#allocation10 + $0x8] sm:$0xff] %v497
    %502 = vst [vmem:[#allocation10 + $0x10] sm:$0xff] %v498
    %503 = vst [vmem:[#allocation10 + $0x18] sm:$0xff] %v499
    // Predicated region
    $region50: #{tpu_custom_call.1} parent=1 // pred_check
      _
    $region51: #{tpu_custom_call.1} parent=1 // pred_check_branch
      %505 = sbr.rel (0) target = $region53
    $region52: #{tpu_custom_call.1} parent=1 // pred_region
      %s507 = ssub.s32 512, 512
      %508 = vsyncadd [#allocation4], %s507
      %s509 = sshll.u32 [#allocation10], 4
      %s510 = int_to_ptr.vmem [resolvable:$true] %s509
      %515 = dma.vmem_to_hbm [thread:$0]  %s510, 512, %s8, [#allocation4], 128, 128, 8
    $region53: #{tpu_custom_call.1} parent=1 // pred_fallthru
      _
    // Predicated region
    $region54: #{tpu_custom_call.1} parent=1 // pred_check
      _
    $region55: #{tpu_custom_call.1} parent=1 // pred_check_branch
      %517 = sbr.rel (0) target = $region57
    $region56: #{tpu_custom_call.1} parent=1 // pred_region
      %518 = dma.done [#allocation4], 512
    $region57: #{tpu_custom_call.1} parent=1 // pred_fallthru
      _
    %519 = vsyncpa [#allocation3], 1
    %520 = vsyncpa [#allocation6], 1
    %521 = vsyncpa [#allocation9], 1
    %522 = vsyncpa [#allocation4], 1

</llo_original>
